<compile_context>
chip_gen: v6e
topology: v6e:2x2x1
jax: 0.10.0
libtpu: 0.0.40
codegen_flags: <defaults>
</compile_context>

<pallas_src>
import jax
import jax.numpy as jnp
from jax import lax
from jax.experimental import pallas as pl
from jax.experimental.pallas import tpu as pltpu


# ----------------------------------------------------------------------------------
# Hardware-keyed configuration (v5e/v6e: 128 MiB VMEM, v7x: 64 MiB)
# ----------------------------------------------------------------------------------

def _tpu_vmem_capacity_bytes():
    try:
        return int(pltpu.get_tpu_info().vmem_capacity_bytes)
    except Exception:
        return 64 * 1024 * 1024          # conservative (v7x-sized) fallback

_VMEM_CAP = _tpu_vmem_capacity_bytes()
_VMEM_LIMIT = int(min((_VMEM_CAP * 3) // 4, 100 * 1024 * 1024))
_LARGE_VMEM = _VMEM_CAP >= (96 << 20)
_L_TILE_TARGET = 2048 if _LARGE_VMEM else 1024    # lane tile for (C, L) slabs
_ATTN_TQ_TARGET = 1024 if _LARGE_VMEM else 256    # query-row tile for attention
_ATTN_TK_TARGET = 2048 if _LARGE_VMEM else 1024   # key/value tile for attention
_CONV3_ROW_TARGET = 64 if _LARGE_VMEM else 32     # row tile for the 3x3 merge conv
_MM_DTYPE = jnp.bfloat16                          # MXU operand dtype (f32 accumulation)


def _cparams(semantics):
    return pltpu.CompilerParams(dimension_semantics=semantics,
                                vmem_limit_bytes=_VMEM_LIMIT)


def _pick_tile(total, target, mults=(128, 8, 1)):
    """Largest tile <= target dividing `total`; prefers 128-multiples, then 8-multiples.
    Never returns more than `target` (no silent whole-L VMEM blowups).
    TODO(synk): awkward (prime-ish) totals fall back to small divisors; a cdiv grid with
                masked tails would be the full fix."""
    if total <= target:
        return total
    for m in mults:
        best = None
        t = m
        while t <= target:
            if total % t == 0:
                best = t
            t += m
        if best is not None:
            return best
    return 1


def _round_up(x, m):
    return ((x + m - 1) // m) * m


# ----------------------------------------------------------------------------------
# Pallas kernels
# ----------------------------------------------------------------------------------

def _matmul_bias_kernel(x_ref, w_ref, b_ref, o_ref):
    # x: (1, Cin, TL) any dtype (cast on VPU), w: (Cout, Cin) bf16, b: (Cout, 1) f32
    x = x_ref[0].astype(w_ref.dtype)
    acc = jnp.dot(w_ref[...], x, preferred_element_type=jnp.float32) + b_ref[...]
    o_ref[0] = acc.astype(o_ref.dtype)


def _make_h_vcat_kernel(Cv, Cwp):
    """h 1x1-conv emitting the attention value slab [V | V^2 | 1 | 0-pad] transposed to
    (TL, Cwp), so the flash attention P@V step is one canonical MXU matmul."""
    pad = Cwp - (2 * Cv + 1)

    def kernel(x_ref, w_ref, b_ref, o_ref):
        x = x_ref[0].astype(w_ref.dtype)                      # (Cin, TL)
        y = lax.dot_general(x, w_ref[...], (((0,), (1,)), ((), ())),
                            preferred_element_type=jnp.float32) + b_ref[...]   # (TL, Cv)
        tl = y.shape[0]
        o_ref[0, :, :Cv] = y.astype(o_ref.dtype)
        o_ref[0, :, Cv:2 * Cv] = (y * y).astype(o_ref.dtype)  # V^2 computed in f32
        o_ref[0, :, 2 * Cv:2 * Cv + 1] = jnp.ones((tl, 1), o_ref.dtype)
        if pad > 0:
            o_ref[0, :, 2 * Cv + 1:] = jnp.zeros((tl, pad), o_ref.dtype)
    return kernel


def _make_channel_stats_kernel(L):
    """Per-channel mean and 1/sqrt(var+1e-5) (unbiased), L-tiled with scratch accum."""
    def kernel(x_ref, mean_ref, rstd_ref, s_sc, ss_sc):
        li = pl.program_id(1)

        @pl.when(li == 0)
        def _():
            s_sc[...] = jnp.zeros(s_sc.shape, s_sc.dtype)
            ss_sc[...] = jnp.zeros(ss_sc.shape, ss_sc.dtype)

        x = x_ref[0]
        s_sc[...] += jnp.sum(x, axis=1, keepdims=True)
        ss_sc[...] += jnp.sum(x * x, axis=1, keepdims=True)

        @pl.when(li == pl.num_programs(1) - 1)
        def _():
            mean = s_sc[...] / float(L)
            var = (ss_sc[...] - float(L) * mean * mean) / float(max(L - 1, 1))
            mean_ref[0] = mean
            rstd_ref[0] = lax.rsqrt(jnp.maximum(var, 0.0) + 1e-5)
    return kernel


def _normalize_kernel(x_ref, mean_ref, rstd_ref, o_ref):
    # (x - mean) * rstd ; output dtype may be bf16 at the producer
    o_ref[0] = ((x_ref[0] - mean_ref[0]) * rstd_ref[0]).astype(o_ref.dtype)


def _make_attn_kernel(Cv):
    """Flash-style AdaAttN.  Grid = (N, Lq-tiles, Lk-tiles), Lk innermost ("arbitrary").
    q: (1, K, TQ) bf16, g: (1, K, TK) bf16, v: (1, TK, Cwp) bf16 = [V | V^2 | 1 | 0]
    c: (1, Cv, TQ) f32 (raw content), cmean/crstd: (1, Cv, 1) f32
    feat: (1, Cv, TQ) bf16 = std * nor_mean_std(content) + mean (attention map S never
    materialized; unused upstream)."""
    def kernel(q_ref, g_ref, v_ref, c_ref, cmean_ref, crstd_ref, feat_ref,
               m_sc, acc_sc):
        ki = pl.program_id(2)

        @pl.when(ki == 0)
        def _():
            m_sc[...] = jnp.full(m_sc.shape, -jnp.inf, m_sc.dtype)
            acc_sc[...] = jnp.zeros(acc_sc.shape, acc_sc.dtype)

        # s = q^T g  (MXU consumes the transposed LHS natively)
        s = lax.dot_general(q_ref[0], g_ref[0], (((0,), (0,)), ((), ())),
                            preferred_element_type=jnp.float32)          # (TQ, TK)
        m_prev = m_sc[...]
        m_new = jnp.maximum(m_prev, jnp.max(s, axis=-1, keepdims=True))  # (TQ, 1)
        corr = jnp.exp(m_prev - m_new)
        p = jnp.exp(s - m_new)                                           # (TQ, TK)
        # one matmul gives [p@V, p@V^2, sum(p)] in the accumulator columns
        acc_sc[...] = corr * acc_sc[...] + jnp.dot(
            p.astype(v_ref.dtype), v_ref[0], preferred_element_type=jnp.float32)
        m_sc[...] = m_new

        @pl.when(ki == pl.num_programs(2) - 1)
        def _():
            acc = acc_sc[...]
            inv_l = 1.0 / acc[:, 2 * Cv:2 * Cv + 1]        # exact divide (bias-free)
            mean = acc[:, :Cv] * inv_l                     # (TQ, Cv)
            e2 = acc[:, Cv:2 * Cv] * inv_l
            std = jnp.sqrt(jnp.maximum(e2 - mean * mean, 0.0))
            cn = (c_ref[0] - cmean_ref[0]) * crstd_ref[0]  # fused nor_mean_std(content)
            feat_ref[0] = (std.T * cn + mean.T).astype(feat_ref.dtype)
    return kernel


def _make_whiten_stats_kernel(L):
    """SwitchWhiten2d statistics, L-tiled: mean (C,1), cov (C,C) = E[xx^T]-mm^T, and the
    global content min/max (clamp limits) fused in for free."""
    def kernel(x_ref, mean_ref, cov_ref, mm_ref, s_sc, g_sc, mn_sc, mx_sc):
        li = pl.program_id(1)

        @pl.when(li == 0)
        def _():
            s_sc[...] = jnp.zeros(s_sc.shape, s_sc.dtype)
            g_sc[...] = jnp.zeros(g_sc.shape, g_sc.dtype)
            mn_sc[...] = jnp.full(mn_sc.shape, jnp.inf, mn_sc.dtype)
            mx_sc[...] = jnp.full(mx_sc.shape, -jnp.inf, mx_sc.dtype)

        x = x_ref[0]                                                      # (C, TL)
        s_sc[...] += jnp.sum(x, axis=1, keepdims=True)
        g_sc[...] += lax.dot_general(x, x, (((1,), (1,)), ((), ())),
                                     preferred_element_type=jnp.float32)  # (C, C)
        mn_sc[...] = jnp.minimum(mn_sc[...], jnp.min(x))
        mx_sc[...] = jnp.maximum(mx_sc[...], jnp.max(x))

        @pl.when(li == pl.num_programs(1) - 1)
        def _():
            mean = s_sc[...] / float(L)
            mean_ref[0] = mean
            cov_ref[0] = g_sc[...] / float(L) - mean * mean.T
            mm_ref[0, :, 0:1] = mn_sc[...]
            mm_ref[0, :, 1:2] = mx_sc[...]
    return kernel


def _newton_whiten_kernel(cov_ref, wm_ref):
    # cov: (1, C, C) -> whitening matrix wm (1, C, C) via 5 Newton-Schulz steps (tiny).
    C = cov_ref.shape[1]
    r = lax.broadcasted_iota(jnp.int32, (C, C), 0)
    c = lax.broadcasted_iota(jnp.int32, (C, C), 1)
    eye = (r == c).astype(jnp.float32)
    cov = cov_ref[0] + 1e-5 * eye
    rTr = 1.0 / jnp.sum(cov * eye)
    cov_n = cov * rTr
    P = eye
    for _ in range(5):  # static unrolled loop (matches torch 5-iteration loop)
        P3 = jnp.dot(jnp.dot(P, P, preferred_element_type=jnp.float32), P,
                     preferred_element_type=jnp.float32)
        P = 1.5 * P - 0.5 * jnp.dot(P3, cov_n, preferred_element_type=jnp.float32)
    wm_ref[0] = P * jnp.sqrt(rTr)


def _wct_blend_kernel(clims_ref, alpha_ref, m_ref, c_ref, cmean_ref, smean_ref,
                      local_ref, o_ref):
    # Fused: t = clamp(M @ (c - mean_c) + s_mean, lo, hi); o = (1-a)*t + a*local
    # M = inv(wm_s) @ wm_c precomputed (tiny C x C bmm) -> one big matmul, no HBM
    # round trip for whiten_c / global_feat.
    a = alpha_ref[pl.program_id(0)]
    lo = clims_ref[0]
    hi = clims_ref[1]
    xc = (c_ref[0] - cmean_ref[0]).astype(m_ref.dtype)
    t = jnp.dot(m_ref[0], xc, preferred_element_type=jnp.float32) + smean_ref[0]
    t = jnp.maximum(jnp.minimum(t, hi), lo)
    o_ref[0] = ((1.0 - a) * t + a * local_ref[0].astype(jnp.float32)).astype(o_ref.dtype)


def _make_conv3x3_kernel(TH, W):
    # Row-tiled reflection-padded 3x3 conv: input block (Cin, TH+2, W+2) (halo rows),
    # 3 lane shifts (kx) x 3 row slices (ky) -> 9 accumulated matmuls, no im2col tensor.
    def kernel(x_ref, w_ref, b_ref, o_ref):
        acc = jnp.zeros((o_ref.shape[1], o_ref.shape[2]), jnp.float32)   # (Cout, TH*W)
        x = x_ref[0]                                                     # (Cin, TH+2, W+2)
        cin = x.shape[0]
        for kx in range(3):
            xs = x[:, :, kx:kx + W]                                      # one lane shift per kx
            for ky in range(3):
                sub = xs[:, ky:ky + TH, :].reshape(cin, TH * W)
                acc = acc + jnp.dot(w_ref[ky * 3 + kx], sub,
                                    preferred_element_type=jnp.float32)
        o_ref[0] = (acc + b_ref[...]).astype(o_ref.dtype)
    return kernel


# ----------------------------------------------------------------------------------
# Wrappers
# ----------------------------------------------------------------------------------

def matmul_bias_ncl(x, w, b, out_dtype=jnp.float32):
    """x: (N, Cin, L) any dtype, w: (Cout, Cin), b: (Cout,) -> (N, Cout, L).
    L-tiled, resident bf16 weights, in-kernel VPU cast of x (no wrapper convert pass)."""
    N, Cin, L = x.shape
    Cout = w.shape[0]
    TL = _pick_tile(L, _L_TILE_TARGET)
    return pl.pallas_call(
        _matmul_bias_kernel,
        out_shape=jax.ShapeDtypeStruct((N, Cout, L), out_dtype),
        grid=(N, L // TL),
        in_specs=[pl.BlockSpec((1, Cin, TL), lambda n, l: (n, 0, l)),
                  pl.BlockSpec((Cout, Cin), lambda n, l: (0, 0)),
                  pl.BlockSpec((Cout, 1), lambda n, l: (0, 0))],
        out_specs=pl.BlockSpec((1, Cout, TL), lambda n, l: (n, 0, l)),
        compiler_params=_cparams(("parallel", "parallel")),
    )(x, w.astype(_MM_DTYPE), b.reshape(Cout, 1).astype(jnp.float32))


def conv1x1(x_nchw, w, b, out_dtype=jnp.float32):
    N, Cin, H, W = x_nchw.shape
    out = matmul_bias_ncl(x_nchw.reshape(N, Cin, H * W), w, b, out_dtype=out_dtype)
    return out.reshape(N, w.shape[0], H, W)


def conv1x1_vcat(style_nchw, w, b, Cwp):
    """h 1x1 conv fused with the [V | V^2 | 1 | 0-pad] value-slab construction,
    emitted transposed as (N, L, Cwp) bf16."""
    N, Cin, H, W = style_nchw.shape
    Cv = w.shape[0]
    L = H * W
    TL = _pick_tile(L, _L_TILE_TARGET)
    return pl.pallas_call(
        _make_h_vcat_kernel(Cv, Cwp),
        out_shape=jax.ShapeDtypeStruct((N, L, Cwp), _MM_DTYPE),
        grid=(N, L // TL),
        in_specs=[pl.BlockSpec((1, Cin, TL), lambda n, l: (n, 0, l)),
                  pl.BlockSpec((Cv, Cin), lambda n, l: (0, 0)),
                  pl.BlockSpec((1, Cv), lambda n, l: (0, 0))],
        out_specs=pl.BlockSpec((1, TL, Cwp), lambda n, l: (n, l, 0)),
        compiler_params=_cparams(("parallel", "parallel")),
    )(style_nchw.reshape(N, Cin, L), w.astype(_MM_DTYPE),
      b.reshape(1, Cv).astype(jnp.float32))


def channel_stats(x_ncl):
    """Per-channel mean and 1/std (unbiased, eps=1e-5).  L-tiled, tiny (N,C,1) outputs."""
    N, C, L = x_ncl.shape
    TL = _pick_tile(L, _L_TILE_TARGET)
    return pl.pallas_call(
        _make_channel_stats_kernel(L),
        out_shape=(jax.ShapeDtypeStruct((N, C, 1), jnp.float32),
                   jax.ShapeDtypeStruct((N, C, 1), jnp.float32)),
        grid=(N, L // TL),
        in_specs=[pl.BlockSpec((1, C, TL), lambda n, l: (n, 0, l))],
        out_specs=(pl.BlockSpec((1, C, 1), lambda n, l: (n, 0, 0)),
                   pl.BlockSpec((1, C, 1), lambda n, l: (n, 0, 0))),
        scratch_shapes=[pltpu.VMEM((C, 1), jnp.float32),
                        pltpu.VMEM((C, 1), jnp.float32)],
        compiler_params=_cparams(("parallel", "arbitrary")),
    )(x_ncl.astype(jnp.float32))


def nor_mean_std(x_nchw, out_dtype=jnp.float32):
    """torch nor_mean_std: (x - mean) / sqrt(var_unbiased + 1e-5), per channel."""
    N, C, H, W = x_nchw.shape
    L = H * W
    x = x_nchw.reshape(N, C, L).astype(jnp.float32)
    mean, rstd = channel_stats(x)
    TL = _pick_tile(L, _L_TILE_TARGET)
    out = pl.pallas_call(
        _normalize_kernel,
        out_shape=jax.ShapeDtypeStruct((N, C, L), out_dtype),
        grid=(N, L // TL),
        in_specs=[pl.BlockSpec((1, C, TL), lambda n, l: (n, 0, l)),
                  pl.BlockSpec((1, C, 1), lambda n, l: (n, 0, 0)),
                  pl.BlockSpec((1, C, 1), lambda n, l: (n, 0, 0))],
        out_specs=pl.BlockSpec((1, C, TL), lambda n, l: (n, 0, l)),
        compiler_params=_cparams(("parallel", "parallel")),
    )(x, mean, rstd)
    return out.reshape(N, C, H, W)


def resize_nearest(x, out_h, out_w):
    """Matches torch F.interpolate(..., mode='nearest'), NCHW."""
    N, C, H, W = x.shape
    if (H, W) == (out_h, out_w):
        return x
    ridx = (jnp.arange(out_h) * H) // out_h
    cidx = (jnp.arange(out_w) * W) // out_w
    return x[:, :, ridx[:, None], cidx[None, :]]


def conv3x3_reflect(x, w, b, out_dtype=_MM_DTYPE):
    """Reflection-pad(1) + 3x3 conv, row-tiled with halo windows gathered in the wrapper
    (one cheap XLA gather) so the Pallas grid stays cleanly double-buffered."""
    N, Cin, H, W = x.shape
    Cout = w.shape[0]
    Wp = W + 2
    TH = _pick_tile(H, _CONV3_ROW_TARGET, mults=(8, 2, 1))
    HT = H // TH
    THp = TH + 2
    xp = jnp.pad(x, ((0, 0), (0, 0), (1, 1), (1, 1)), mode="reflect")      # (N,Cin,H+2,Wp)
    row_idx = jnp.arange(HT)[:, None] * TH + jnp.arange(THp)[None, :]      # (HT, THp)
    xwin = xp[:, :, row_idx, :]                                            # (N,Cin,HT,THp,Wp)
    xwin = jnp.moveaxis(xwin, 2, 1).reshape(N * HT, Cin, THp, Wp)
    w9 = w.transpose(2, 3, 0, 1).reshape(9, Cout, Cin)                     # (ky,kx,Co,Ci)->(9,Co,Ci)
    out = pl.pallas_call(
        _make_conv3x3_kernel(TH, W),
        out_shape=jax.ShapeDtypeStruct((N, Cout, H * W), out_dtype),
        grid=(N, HT),
        in_specs=[pl.BlockSpec((1, Cin, THp, Wp), lambda n, t: (n * HT + t, 0, 0, 0)),
                  pl.BlockSpec((9, Cout, Cin), lambda n, t: (0, 0, 0)),
                  pl.BlockSpec((Cout, 1), lambda n, t: (0, 0))],
        out_specs=pl.BlockSpec((1, Cout, TH * W), lambda n, t: (n, 0, t)),
        compiler_params=_cparams(("parallel", "parallel")),
    )(xwin.astype(_MM_DTYPE), w9.astype(_MM_DTYPE),
      b.reshape(Cout, 1).astype(jnp.float32))
    return out.reshape(N, Cout, H, W)


def ada_attn(content, style, content_key, style_key, p, max_sample=256 * 256):
    """AdaptiveMultiAdaAttN_v2.forward (attention map S not materialized: unused upstream)."""
    Fq = conv1x1(content_key, p["f_w"], p["f_b"], out_dtype=_MM_DTYPE)   # (N, K, h, w)
    G = conv1x1(style_key, p["g_w"], p["g_b"], out_dtype=_MM_DTYPE)      # (N, K, hg, wg)

    N, K, h, w = Fq.shape
    _, _, hg, wg = G.shape
    Lq, Lk = h * w, hg * wg
    Cv = p["h_w"].shape[0]
    Cwp = _round_up(2 * Cv + 1, 128)

    if style.shape[2:] == (hg, wg):
        # common case in this architecture (bicubic resize to same size is identity)
        vcat = conv1x1_vcat(style, p["h_w"], p["h_b"], Cwp)              # (N, Lk, Cwp) bf16
    else:
        # TODO(synk): torch bicubic (align_corners=False) differs slightly from jax cubic resize
        Hs = conv1x1(style, p["h_w"], p["h_b"], out_dtype=jnp.float32)
        Hs = jax.image.resize(Hs, (N, Cv, hg, wg), method="cubic")
        vt = Hs.reshape(N, Cv, Lk).transpose(0, 2, 1)
        vcat = jnp.concatenate(
            [vt, vt * vt, jnp.ones((N, Lk, 1), jnp.float32),
             jnp.zeros((N, Lk, Cwp - 2 * Cv - 1), jnp.float32)], axis=-1).astype(_MM_DTYPE)
    # TODO(synk): torch.randperm sub-sampling branch (hg*wg > max_sample) not reproduced
    #             (never taken at these sizes).

    q = Fq.reshape(N, K, Lq)                               # (N, K, Lq) bf16, no transpose
    g = G.reshape(N, K, Lk)                                # (N, K, Lk) bf16
    c = content.reshape(N, Cv, Lq).astype(jnp.float32)
    cmean, crstd = channel_stats(c)                        # nor_mean_std fused into attention

    TQ = _pick_tile(Lq, _ATTN_TQ_TARGET)
    TK = _pick_tile(Lk, _ATTN_TK_TARGET)

    feat = pl.pallas_call(
        _make_attn_kernel(Cv),
        out_shape=jax.ShapeDtypeStruct((N, Cv, Lq), _MM_DTYPE),
        grid=(N, Lq // TQ, Lk // TK),
        in_specs=[pl.BlockSpec((1, K, TQ), lambda n, qi, ki: (n, 0, qi)),
                  pl.BlockSpec((1, K, TK), lambda n, qi, ki: (n, 0, ki)),
                  pl.BlockSpec((1, TK, Cwp), lambda n, qi, ki: (n, ki, 0)),
                  pl.BlockSpec((1, Cv, TQ), lambda n, qi, ki: (n, 0, qi)),
                  pl.BlockSpec((1, Cv, 1), lambda n, qi, ki: (n, 0, 0)),
                  pl.BlockSpec((1, Cv, 1), lambda n, qi, ki: (n, 0, 0))],
        out_specs=pl.BlockSpec((1, Cv, TQ), lambda n, qi, ki: (n, 0, qi)),
        scratch_shapes=[pltpu.VMEM((TQ, 1), jnp.float32),
                        pltpu.VMEM((TQ, Cwp), jnp.float32)],
        compiler_params=_cparams(("parallel", "parallel", "arbitrary")),
    )(q, g, vcat, c, cmean, crstd)
    return feat.reshape(N, Cv, h, w)


def transformer_forward(c41, s41, c51, s51, c41k, s41k, c51k, s51k, params):
    """AdaptiveMultiAttn_Transformer_v2.forward (attention maps dropped: never consumed)."""
    f41 = ada_attn(c41, s41, c41k, s41k, params["attn41"])       # bf16
    f51 = ada_attn(c51, s51, c51k, s51k, params["attn51"])       # bf16
    f51_up = resize_nearest(f51, f41.shape[2], f41.shape[3])
    merged = f41 + f51_up                                        # bf16, single XLA fusion
    stylized = conv3x3_reflect(merged, params["merge_w"], params["merge_b"],
                               out_dtype=_MM_DTYPE)
    return stylized, f41, f51


def switch_whiten_stats(x_nchw):
    """SwitchWhiten2d statistics: whitening matrix wm (N,C,C), channel mean (N,C,1) and
    (fused for free) the per-batch min/max of the input."""
    N, C, H, W = x_nchw.shape
    L = H * W
    x = x_nchw.reshape(N, C, L).astype(jnp.float32)
    TL = _pick_tile(L, _L_TILE_TARGET)
    mean, cov, minmax = pl.pallas_call(
        _make_whiten_stats_kernel(L),
        out_shape=(jax.ShapeDtypeStruct((N, C, 1), jnp.float32),
                   jax.ShapeDtypeStruct((N, C, C), jnp.float32),
                   jax.ShapeDtypeStruct((N, 1, 2), jnp.float32)),
        grid=(N, L // TL),
        in_specs=[pl.BlockSpec((1, C, TL), lambda n, l: (n, 0, l))],
        out_specs=(pl.BlockSpec((1, C, 1), lambda n, l: (n, 0, 0)),
                   pl.BlockSpec((1, C, C), lambda n, l: (n, 0, 0)),
                   pl.BlockSpec((1, 1, 2), lambda n, l: (n, 0, 0))),
        scratch_shapes=[pltpu.VMEM((C, 1), jnp.float32),
                        pltpu.VMEM((C, C), jnp.float32),
                        pltpu.VMEM((1, 1), jnp.float32),
                        pltpu.VMEM((1, 1), jnp.float32)],
        compiler_params=_cparams(("parallel", "arbitrary")),
    )(x)
    wm = pl.pallas_call(
        _newton_whiten_kernel,
        out_shape=jax.ShapeDtypeStruct((N, C, C), jnp.float32),
        grid=(N,),
        in_specs=[pl.BlockSpec((1, C, C), lambda n: (n, 0, 0))],
        out_specs=pl.BlockSpec((1, C, C), lambda n: (n, 0, 0)),
        compiler_params=_cparams(("parallel",)),
    )(cov)
    return wm, mean, minmax


def feature_wct_blend(content, style, local_feat, adaptive_alpha):
    """Fused Bw_wct_core (feature_wct_simple with wct-alpha=1, as in the torch forward)
    + the adaptive-alpha global/local blend, in one L-tiled kernel."""
    N, C, H, W = content.shape
    L = H * W
    wm_c, mean_c, c_minmax = switch_whiten_stats(content)
    wm_s, mean_s, _ = switch_whiten_stats(style)
    cont_min = jnp.min(c_minmax[:, 0, 0])
    cont_max = jnp.max(c_minmax[:, 0, 1])
    # TODO(synk): matrix inverse has no Pallas primitive; tiny (N,C,C) inverse in JAX glue.
    m = jnp.matmul(jnp.linalg.inv(wm_s), wm_c)            # (N, C, C), tiny
    clims = jnp.stack([cont_min, cont_max]).astype(jnp.float32)

    TL = _pick_tile(L, _L_TILE_TARGET)
    out = pl.pallas_call(
        _wct_blend_kernel,
        out_shape=jax.ShapeDtypeStruct((N, C, L), jnp.float32),
        grid=(N, L // TL),
        in_specs=[pl.BlockSpec(memory_space=pltpu.MemorySpace.SMEM),     # clims (2,)
                  pl.BlockSpec(memory_space=pltpu.MemorySpace.SMEM),     # alpha (N,)
                  pl.BlockSpec((1, C, C), lambda n, l: (n, 0, 0)),
                  pl.BlockSpec((1, C, TL), lambda n, l: (n, 0, l)),
                  pl.BlockSpec((1, C, 1), lambda n, l: (n, 0, 0)),
                  pl.BlockSpec((1, C, 1), lambda n, l: (n, 0, 0)),
                  pl.BlockSpec((1, C, TL), lambda n, l: (n, 0, l))],
        out_specs=pl.BlockSpec((1, C, TL), lambda n, l: (n, 0, l)),
        compiler_params=_cparams(("parallel", "parallel")),
    )(clims, adaptive_alpha.astype(jnp.float32), m.astype(_MM_DTYPE),
      content.reshape(N, C, L).astype(jnp.float32), mean_c, mean_s,
      local_feat.reshape(N, C, L))
    return out.reshape(N, C, H, W)


def adaptive_get_keys(feat_skips, start_layer_idx, last_layer_idx, target_feat):
    """AsePaTrans.adaptive_get_keys (mode='none'); keys emitted in bf16 (consumed only by
    the bf16 f/g 1x1 convs) to avoid a standalone convert pass."""
    _, _, th, tw = target_feat.shape
    _, _, h, w = feat_skips["conv%d_1" % last_layer_idx].shape
    results = []
    for i in range(start_layer_idx, last_layer_idx + 1):
        feat = feat_skips["conv%d_1" % i]
        if i == last_layer_idx:
            results.append(nor_mean_std(feat, out_dtype=_MM_DTYPE))
        else:
            results.append(nor_mean_std(resize_nearest(feat, h, w), out_dtype=_MM_DTYPE))
    return resize_nearest(jnp.concatenate(results, axis=1), th, tw)


def asepa_trans_core(content_skips, style_skips, params, adaptive_alpha):
    """AsePaTrans.forward, from encoder skips to the pre-decoder stylized feature."""
    c41k = adaptive_get_keys(content_skips, 4, 4, content_skips["conv4_1"])
    s41k = adaptive_get_keys(style_skips, 1, 4, style_skips["conv4_1"])
    c51k = adaptive_get_keys(content_skips, 5, 5, content_skips["conv5_1"])
    s51k = adaptive_get_keys(style_skips, 1, 5, style_skips["conv5_1"])

    local_feat, _f41, _f51 = transformer_forward(
        content_skips["conv4_1"], style_skips["conv4_1"],
        content_skips["conv5_1"], style_skips["conv5_1"],
        c41k, s41k, c51k, s51k, params)

    # global WCT (feature_wct_simple, alpha=1) fused with the adaptive blend
    transformed = feature_wct_blend(content_skips["conv4_1"], style_skips["conv4_1"],
                                    local_feat, adaptive_alpha)
    return transformed


# ----------------------------------------------------------------------------------
# Deterministic parameter / input construction and demo run
# ----------------------------------------------------------------------------------

def init_attn_params(key, query_planes, key_planes, in_planes, out_planes, scale=0.05):
    ks = jax.random.split(key, 6)
    return dict(
        f_w=scale * jax.random.normal(ks[0], (key_planes, query_planes), jnp.float32),
        f_b=scale * jax.random.normal(ks[1], (key_planes,), jnp.float32),
        g_w=scale * jax.random.normal(ks[2], (key_planes, key_planes), jnp.float32),
        g_b=scale * jax.random.normal(ks[3], (key_planes,), jnp.float32),
        h_w=scale * jax.random.normal(ks[4], (out_planes, in_planes), jnp.float32),
        h_b=scale * jax.random.normal(ks[5], (out_planes,), jnp.float32),
        # out_conv of AdaptiveMultiAdaAttN_v2 is defined but unused in forward -> omitted
    )


if __name__ == "__main__":
    key = jax.random.PRNGKey(0)

    # Scaled-down VGG channel pyramid (real: 64/128/256/512/512).
    N = 2
    c1, c2, c3, c4, c5 = 4, 8, 16, 32, 32
    in_planes = out_planes = 32          # real: 512
    query_planes = 32                    # real: 512
    key_planes_41 = c1 + c2 + c3 + c4    # real: 64+128+256+512 = 960
    key_planes_51 = key_planes_41 + c5   # real: 960+512

    shapes = {
        "conv1_1": (N, c1, 16, 16),
        "conv2_1": (N, c2, 8, 8),
        "conv3_1": (N, c3, 8, 8),
        "conv4_1": (N, c4, 8, 8),
        "conv5_1": (N, c5, 4, 4),
    }

    keys = jax.random.split(key, 16)
    content_skips = {name: jax.random.normal(keys[i], shp, jnp.float32)
                     for i, (name, shp) in enumerate(shapes.items())}
    style_skips = {name: jax.random.normal(keys[5 + i], shp, jnp.float32)
                   for i, (name, shp) in enumerate(shapes.items())}

    params = dict(
        attn41=init_attn_params(keys[10], query_planes, key_planes_41, in_planes, out_planes),
        attn51=init_attn_params(keys[11], query_planes, key_planes_51, in_planes, out_planes),
        merge_w=0.05 * jax.random.normal(keys[12], (out_planes, out_planes, 3, 3), jnp.float32),
        merge_b=0.05 * jax.random.normal(keys[13], (out_planes,), jnp.float32),
    )

    # TODO(synk): adaptive_gram_weight requires the pretrained VGG encoder; use a fixed
    # deterministic per-batch alpha instead.
    adaptive_alpha = jnp.full((N,), 0.6, jnp.float32)

    out = asepa_trans_core(content_skips, style_skips, params, adaptive_alpha)
    jax.block_until_ready(out)
    assert out.shape == (N, out_planes, 8, 8)
    print("KERNEL_OK")
</pallas_src>

<mosaic_0001>
module attributes {stable_mosaic.version = 11 : i64} {
  func.func @kernel(%arg0: i32, %arg1: i32, %arg2: memref<1x32x64xf32, #tpu.memory_space<vmem>>, %arg3: memref<1x32x1xf32, #tpu.memory_space<vmem>>, %arg4: memref<1x32x1xf32, #tpu.memory_space<vmem>>, %arg5: memref<32x1xf32, #tpu.memory_space<vmem>>, %arg6: memref<32x1xf32, #tpu.memory_space<vmem>>) attributes {dimension_semantics = [#tpu.dimension_semantics<parallel>, #tpu.dimension_semantics<arbitrary>], iteration_bounds = array<i64: 2, 1>, scalar_prefetch = 0 : i64, scratch_operands = 2 : i64, tpu.core_type = #tpu.core_type<tc>, window_params = [{transform_indices = @transform_0, window_bounds = array<i64: 1, 32, 64>}, {transform_indices = @transform_1, window_bounds = array<i64: 1, 32, 1>}, {transform_indices = @transform_2, window_bounds = array<i64: 1, 32, 1>}]} {
    %c0_i32 = arith.constant 0 : i32
    %0 = arith.cmpi eq, %arg1, %c0_i32 : i32
    %1 = arith.extui %0 : i1 to i32
    %c0_i32_0 = arith.constant 0 : i32
    %2 = arith.cmpi ne, %1, %c0_i32_0 : i32
    scf.if %2 {
      %cst_14 = arith.constant 0.000000e+00 : f32
      %19 = vector.broadcast %cst_14 : f32 to vector<32x1xf32>
      %c0_15 = arith.constant 0 : index
      %c0_16 = arith.constant 0 : index
      %20 = vector.load %arg5[%c0_15, %c0_16] : memref<32x1xf32, #tpu.memory_space<vmem>>, vector<32x1xf32>
      tpu.vector_store %arg5[%c0_15, %c0_16], %19 {strides = array<i32>} : memref<32x1xf32, #tpu.memory_space<vmem>>, vector<32x1xf32>,
      %cst_17 = arith.constant 0.000000e+00 : f32
      %21 = vector.broadcast %cst_17 : f32 to vector<32x1xf32>
      %c0_18 = arith.constant 0 : index
      %c0_19 = arith.constant 0 : index
      %22 = vector.load %arg6[%c0_18, %c0_19] : memref<32x1xf32, #tpu.memory_space<vmem>>, vector<32x1xf32>
      tpu.vector_store %arg6[%c0_18, %c0_19], %21 {strides = array<i32>} : memref<32x1xf32, #tpu.memory_space<vmem>>, vector<32x1xf32>,
    } else {
    }
    %c0 = arith.constant 0 : index
    %c0_1 = arith.constant 0 : index
    %c0_2 = arith.constant 0 : index
    %3 = vector.load %arg2[%c0, %c0_1, %c0_2] : memref<1x32x64xf32, #tpu.memory_space<vmem>>, vector<1x32x64xf32>
    %4 = vector.shape_cast %3 : vector<1x32x64xf32> to vector<32x64xf32>
    %c0_3 = arith.constant 0 : index
    %c0_4 = arith.constant 0 : index
    %5 = vector.load %arg5[%c0_3, %c0_4] : memref<32x1xf32, #tpu.memory_space<vmem>>, vector<32x1xf32>
    %cst = arith.constant dense<0.000000e+00> : vector<32xf32>
    %6 = vector.multi_reduction <add>, %4, %cst [1] : vector<32x64xf32> to vector<32xf32>
    %7 = vector.shape_cast %6 : vector<32xf32> to vector<32x1xf32>
    %8 = arith.addf %5, %7 : vector<32x1xf32>
    %c0_5 = arith.constant 0 : index
    %c0_6 = arith.constant 0 : index
    %9 = vector.load %arg5[%c0_5, %c0_6] : memref<32x1xf32, #tpu.memory_space<vmem>>, vector<32x1xf32>
    tpu.vector_store %arg5[%c0_5, %c0_6], %8 {strides = array<i32>} : memref<32x1xf32, #tpu.memory_space<vmem>>, vector<32x1xf32>,
    %c0_7 = arith.constant 0 : index
    %c0_8 = arith.constant 0 : index
    %10 = vector.load %arg6[%c0_7, %c0_8] : memref<32x1xf32, #tpu.memory_space<vmem>>, vector<32x1xf32>
    %11 = arith.mulf %4, %4 : vector<32x64xf32>
    %cst_9 = arith.constant dense<0.000000e+00> : vector<32xf32>
    %12 = vector.multi_reduction <add>, %11, %cst_9 [1] : vector<32x64xf32> to vector<32xf32>
    %13 = vector.shape_cast %12 : vector<32xf32> to vector<32x1xf32>
    %14 = arith.addf %10, %13 : vector<32x1xf32>
    %c0_10 = arith.constant 0 : index
    %c0_11 = arith.constant 0 : index
    %15 = vector.load %arg6[%c0_10, %c0_11] : memref<32x1xf32, #tpu.memory_space<vmem>>, vector<32x1xf32>
    tpu.vector_store %arg6[%c0_10, %c0_11], %14 {strides = array<i32>} : memref<32x1xf32, #tpu.memory_space<vmem>>, vector<32x1xf32>,
    %c0_i32_12 = arith.constant 0 : i32
    %16 = arith.cmpi eq, %arg1, %c0_i32_12 : i32
    %17 = arith.extui %16 : i1 to i32
    %c0_i32_13 = arith.constant 0 : i32
    %18 = arith.cmpi ne, %17, %c0_i32_13 : i32
    scf.if %18 {
      %c0_14 = arith.constant 0 : index
      %c0_15 = arith.constant 0 : index
      %19 = vector.load %arg5[%c0_14, %c0_15] : memref<32x1xf32, #tpu.memory_space<vmem>>, vector<32x1xf32>
      %cst_16 = arith.constant 6.400000e+01 : f32
      %20 = vector.broadcast %cst_16 : f32 to vector<32x1xf32>
      %21 = arith.divf %19, %20 : vector<32x1xf32>
      %c0_17 = arith.constant 0 : index
      %c0_18 = arith.constant 0 : index
      %22 = vector.load %arg6[%c0_17, %c0_18] : memref<32x1xf32, #tpu.memory_space<vmem>>, vector<32x1xf32>
      %cst_19 = arith.constant 6.400000e+01 : f32
      %23 = vector.broadcast %cst_19 : f32 to vector<32x1xf32>
      %24 = arith.mulf %23, %21 : vector<32x1xf32>
      %25 = arith.mulf %24, %21 : vector<32x1xf32>
      %26 = arith.subf %22, %25 : vector<32x1xf32>
      %cst_20 = arith.constant 6.300000e+01 : f32
      %27 = vector.broadcast %cst_20 : f32 to vector<32x1xf32>
      %28 = arith.divf %26, %27 : vector<32x1xf32>
      %c0_21 = arith.constant 0 : index
      %c0_22 = arith.constant 0 : index
      %c0_23 = arith.constant 0 : index
      %29 = vector.load %arg3[%c0_21, %c0_22, %c0_23] : memref<1x32x1xf32, #tpu.memory_space<vmem>>, vector<1x32x1xf32>
      %30 = vector.shape_cast %29 : vector<1x32x1xf32> to vector<32x1xf32>
      %31 = vector.shape_cast %21 : vector<32x1xf32> to vector<1x32x1xf32>
      tpu.vector_store %arg3[%c0_21, %c0_22, %c0_23], %31 {strides = array<i32>} : memref<1x32x1xf32, #tpu.memory_space<vmem>>, vector<1x32x1xf32>,
      %cst_24 = arith.constant 0.000000e+00 : f32
      %32 = vector.broadcast %cst_24 : f32 to vector<32x1xf32>
      %33 = arith.maximumf %28, %32 : vector<32x1xf32>
      %cst_25 = arith.constant 9.99999974E-6 : f32
      %34 = vector.broadcast %cst_25 : f32 to vector<32x1xf32>
      %35 = arith.addf %33, %34 : vector<32x1xf32>
      %36 = math.rsqrt %35 : vector<32x1xf32>
      %c0_26 = arith.constant 0 : index
      %c0_27 = arith.constant 0 : index
      %c0_28 = arith.constant 0 : index
      %37 = vector.load %arg4[%c0_26, %c0_27, %c0_28] : memref<1x32x1xf32, #tpu.memory_space<vmem>>, vector<1x32x1xf32>
      %38 = vector.shape_cast %37 : vector<1x32x1xf32> to vector<32x1xf32>
      %39 = vector.shape_cast %36 : vector<32x1xf32> to vector<1x32x1xf32>
      tpu.vector_store %arg4[%c0_26, %c0_27, %c0_28], %39 {strides = array<i32>} : memref<1x32x1xf32, #tpu.memory_space<vmem>>, vector<1x32x1xf32>,
    } else {
    }
    return
  }
  func.func @transform_0(%arg0: i32, %arg1: i32) -> (i32, i32, i32) {
    %c0_i32 = arith.constant 0 : i32
    %c0_i32_0 = arith.constant 0 : i32
    return %arg0, %c0_i32, %arg1 : i32, i32, i32
  }
  func.func @transform_1(%arg0: i32, %arg1: i32) -> (i32, i32, i32) {
    %c0_i32 = arith.constant 0 : i32
    %c0_i32_0 = arith.constant 0 : i32
    %c0_i32_1 = arith.constant 0 : i32
    return %arg0, %c0_i32, %c0_i32_0 : i32, i32, i32
  }
  func.func @transform_2(%arg0: i32, %arg1: i32) -> (i32, i32, i32) {
    %c0_i32 = arith.constant 0 : i32
    %c0_i32_0 = arith.constant 0 : i32
    %c0_i32_1 = arith.constant 0 : i32
    return %arg0, %c0_i32, %c0_i32_0 : i32, i32, i32
  }
}

</mosaic_0001>

<llo_original>
// kernel: tpu_custom_call.1
$region0: #{tpu_custom_call.1}
  #allocation0 [shape = 'u32[]', space=smem, size = 0x4, offset = 0x4, fixed_abs, tag = 'smem constant byte address 0x4 - core index']
  #allocation1 [shape = 'u32[144,128]{1,0:T(1,128)}', space=vmem, size = 0x12000, scoped, tag = 'internal scratch']
  #allocation2 [shape = 'f32[32,1]{1,0:T(8,128)}', space=vmem, size = 0x4000, scoped, tag = 'scratch operand']
  #allocation3 [shape = 'f32[32,1]{1,0:T(8,128)}', space=vmem, size = 0x4000, scoped, tag = 'scratch operand']
  %s0 = inlined_call_operand.hbm [shape: f32[2,32,64], index: 0, kind: input, shape index: {}]
  %s1 = inlined_call_operand.vmem [shape: f32[2,32,1], index: 1, kind: output, shape index: {0}]
  %s2 = inlined_call_operand.vmem [shape: f32[2,32,1], index: 2, kind: output, shape index: {1}]
  %3 = xla_tuple %s1, %s2
  %s4 = sld [smem:[#allocation0]]
  $region57: #{tpu_custom_call.1} parent=0
    _
  %s6 = ssub.s32 1, %s4
  %s7 = scalar_select 0, %s6, %s4
  $region1: #{tpu_custom_call.1} parent=0
    #allocation4 [shape = 'u8[32768]{0}', space=vmem, size = 0x8000, scoped, tag = 'input window, operand 0']
    #allocation5 [shape = 's32[2]{0}', space=sflag, size = 0x8, scoped, tag = 'scoped memory for tpu_custom_call.1']
    %8 = vsyncpa [#allocation5], 0
    %s9 = scalar_lea.sflag [#allocation5], 1
    %10 = vsyncpa %s9, 0
    loop: start=0, step=1, limit=4
    $region2: #{tpu_custom_call.1} parent=1 // loop_pre_header
      _
    $region3: #{tpu_custom_call.1} parent=1 // loop_header
      %s12 = sphi 0, %s16
      %p13 = scmp.ge.s32.totalorder %s12, 4
      %s19 = sphi 0, %s31
      %s20 = sphi 0, %s27
      %s21 = sphi 0, %s19
      %s22 = sphi 0, %s20
      %s23 = sphi 0, %s21
      %s24 = sphi 0, %s22
      %s36 = sphi 0, %s38
      %s39 = sphi 0, %s36
      %s40 = sphi 0, %s39
      %s56 = sphi 0, %s40
      %s62 = sphi 0, %s64
      %s65 = sphi 0, %s62
      %s66 = sphi 0, %s65
      %s82 = sphi 0, %s66
      %s88 = sphi 0, %s90
      %s91 = sphi 0, %s88
      %s92 = sphi 0, %s91
      %s108 = sphi 0, %s92
    $region4: #{tpu_custom_call.1} parent=1 // loop_header_branch
      %15 = sbr.rel (%p13) target = $region8
    $region5: #{tpu_custom_call.1} parent=1 // loop_body
      %s17 = ssub.s32 %s12, 1
      %s18 = ssub.s32 %s12, 2
      %s25 = sadd.s32 1, %s20
      %p26 = scmp.ge.s32.totalorder %s25, 1
      %s27 = scalar_select %p26, 0, %s25
      %s28 = sadd.s32 1, %s19
      %s29 = scalar_select %p26, %s28, %s19
      %p30 = scmp.ge.s32.totalorder %s29, 2
      %s31 = scalar_select %p30, 0, %s29
      %s32 = ssub.s32 %s19, %s31
      %s33 = ssub.s32 %s20, %s27
      %s34 = sor.u32 %s32, %s33
      %p35 = scmp.eq.s32.totalorder %s34, 0
      %s37 = sadd.s32 %s36, 1
      %s38 = scalar_select %p35, %s36, %s37
      %p41 = pneg %p35
      %p42 = scmp.eq.s32.totalorder %s12, 1
      %p43 = por %p41, %p42
      %p44 = scmp.ne.s32.totalorder %s36, %s39
      %p45 = scmp.eq.s32.totalorder %s12, 0
      %p46 = por %p44, %p45
      %p47 = scmp.ne.s32.totalorder %s36, %s39
      %p48 = scmp.eq.s32.totalorder %s17, 1
      %p49 = por %p47, %p48
      %p50 = scmp.ne.s32.totalorder %s39, %s40
      %p51 = scmp.eq.s32.totalorder %s17, 0
      %p52 = por %p50, %p51
      %p53 = scmp.ne.s32.totalorder %s39, %s40
      %p54 = scmp.eq.s32.totalorder %s18, 1
      %p55 = por %p53, %p54
      %p57 = scmp.ne.s32.totalorder %s40, %s56
      %p58 = scmp.eq.s32.totalorder %s18, 0
      %p59 = por %p57, %p58
      %s60 = ssub.s32 %s19, %s31
      %p61 = scmp.eq.s32.totalorder %s60, 0
      %s63 = sadd.s32 %s62, 1
      %s64 = scalar_select %p61, %s62, %s63
      %p67 = pneg %p61
      %p68 = scmp.eq.s32.totalorder %s12, 1
      %p69 = por %p67, %p68
      %p70 = scmp.ne.s32.totalorder %s62, %s65
      %p71 = scmp.eq.s32.totalorder %s12, 0
      %p72 = por %p70, %p71
      %p73 = scmp.ne.s32.totalorder %s62, %s65
      %p74 = scmp.eq.s32.totalorder %s17, 1
      %p75 = por %p73, %p74
      %p76 = scmp.ne.s32.totalorder %s65, %s66
      %p77 = scmp.eq.s32.totalorder %s17, 0
      %p78 = por %p76, %p77
      %p79 = scmp.ne.s32.totalorder %s65, %s66
      %p80 = scmp.eq.s32.totalorder %s18, 1
      %p81 = por %p79, %p80
      %p83 = scmp.ne.s32.totalorder %s66, %s82
      %p84 = scmp.eq.s32.totalorder %s18, 0
      %p85 = por %p83, %p84
      %s86 = ssub.s32 %s19, %s31
      %p87 = scmp.eq.s32.totalorder %s86, 0
      %s89 = sadd.s32 %s88, 1
      %s90 = scalar_select %p87, %s88, %s89
      %p93 = pneg %p87
      %p94 = scmp.eq.s32.totalorder %s12, 1
      %p95 = por %p93, %p94
      %p96 = scmp.ne.s32.totalorder %s88, %s91
      %p97 = scmp.eq.s32.totalorder %s12, 0
      %p98 = por %p96, %p97
      %p99 = scmp.ne.s32.totalorder %s88, %s91
      %p100 = scmp.eq.s32.totalorder %s17, 1
      %p101 = por %p99, %p100
      %p102 = scmp.ne.s32.totalorder %s91, %s92
      %p103 = scmp.eq.s32.totalorder %s17, 0
      %p104 = por %p102, %p103
      %p105 = scmp.ne.s32.totalorder %s91, %s92
      %p106 = scmp.eq.s32.totalorder %s18, 1
      %p107 = por %p105, %p106
      %p109 = scmp.ne.s32.totalorder %s92, %s108
      %p110 = scmp.eq.s32.totalorder %s18, 0
      %p111 = por %p109, %p110
      %p112 = scmp.le.s32.totalorder 1, %s12
      %p113 = scmp.lt.s32.totalorder %s12, 3
      %p114 = pnand %p112, %p113
      %p115 = pneg %p114
      // Predicated region
      $region9: #{tpu_custom_call.1} parent=5 // pred_check
        _
      $region10: #{tpu_custom_call.1} parent=5 // pred_check_branch
        %117 = sbr.rel (%p114) target = $region12
      $region11: #{tpu_custom_call.1} parent=5 // pred_region
        %s118 = ssub.s32 %s12, 1
      $region12: #{tpu_custom_call.1} parent=5 // pred_fallthru
        _
      %p119 = scmp.lt.s32.totalorder %s12, 2
      // Predicated region
      $region13: #{tpu_custom_call.1} parent=5 // pred_check
        %p120 = pneg %p119
      $region14: #{tpu_custom_call.1} parent=5 // pred_check_branch
        %122 = sbr.rel (%p120) target = $region16
      $region15: #{tpu_custom_call.1} parent=5 // pred_region
        // Predicated region
        $region17: #{tpu_custom_call.1} parent=15 // pred_check
          %p123 = pneg %p46
        $region18: #{tpu_custom_call.1} parent=15 // pred_check_branch
          %125 = sbr.rel (%p123) target = $region20
        $region19: #{tpu_custom_call.1} parent=15 // pred_region
          %s126 = sand.u32 %s36, 1
          %s127 = scalar_lea.sflag [#allocation5], %s126
          %s128 = sand.u32 %s36, 1
          %s129 = smul.addr %s128, 32
          %s130 = scalar_lea.vmem [#allocation4], %s129
          %s132 = ssub.s32 512, 512
          %133 = vsyncadd %s127, %s132
          %s134 = smul.addr %s19, 4
          %s135 = sadd.s32 %s20, %s134
          %s136 = smul.addr %s135, 128
          %s137 = scalar_lea.hbm %s0, %s136
          %s138 = sshll.u32 %s130, 4
          %s139 = int_to_ptr.vmem [resolvable:$true] %s138
          %144 = dma.hbm_to_vmem [thread:$0]  %s137, 512, %s139, %s127, 128, 128, 8
        $region20: #{tpu_custom_call.1} parent=15 // pred_fallthru
          _
      $region16: #{tpu_custom_call.1} parent=5 // pred_fallthru
        _
      %p145 = scmp.le.s32.totalorder 1, %s12
      %p146 = scmp.lt.s32.totalorder %s12, 3
      %p147 = pnand %p145, %p146
      %p148 = pneg %p147
      // Predicated region
      $region21: #{tpu_custom_call.1} parent=5 // pred_check
        _
      $region22: #{tpu_custom_call.1} parent=5 // pred_check_branch
        %150 = sbr.rel (%p147) target = $region24
      $region23: #{tpu_custom_call.1} parent=5 // pred_region
        %s151 = ssub.s32 %s12, 1
        %s152 = sand.u32 %s39, 1
        %s153 = scalar_lea.sflag [#allocation5], %s152
        %s154 = sand.u32 %s39, 1
        %s155 = smul.addr %s154, 32
        %s156 = scalar_lea.vmem [#allocation4], %s155
        // Predicated region
        $region25: #{tpu_custom_call.1} parent=23 // pred_check
          %p157 = pneg %p52
        $region26: #{tpu_custom_call.1} parent=23 // pred_check_branch
          %159 = sbr.rel (%p157) target = $region28
        $region27: #{tpu_custom_call.1} parent=23 // pred_region
          %160 = dma.done %s153, 512
        $region28: #{tpu_custom_call.1} parent=23 // pred_fallthru
          _
        %s161 = sand.u32 %s39, 1
        %s162 = scalar_lea.sflag [#allocation5], %s161
        %s163 = sand.u32 %s39, 1
        %s164 = smul.addr %s163, 32
        %s165 = scalar_lea.vmem [#allocation4], %s164
        %p166 = pneg %p52
        %p167 = pneg %p49
        %p168 = pneg %p78
        %p169 = pneg %p75
        %p170 = scmp.lt.s32.totalorder %s21, 1
        %s171 = scalar_select %p170, %s21, 1
        %s172 = smul.addr %s171, 4
        %s173 = smul.addr %s172, 8
        %s174 = scalar_lea.vmem %s1, %s173
        %p175 = pneg %p104
        %p176 = pneg %p101
        %p177 = scmp.lt.s32.totalorder %s21, 1
        %s178 = scalar_select %p177, %s21, 1
        %s179 = smul.addr %s178, 4
        %s180 = smul.addr %s179, 8
        %s181 = scalar_lea.vmem %s2, %s180
        %p182 = scmp.lt.s32.totalorder %s21, 1
        %s183 = scalar_select %p182, %s21, 1
        %s184 = smul.addr %s183, 4
        %s185 = smul.addr %s184, 8
        %s186 = scalar_lea.vmem %s1, %s185
        %p187 = scmp.lt.s32.totalorder %s21, 1
        %s188 = scalar_select %p187, %s21, 1
        %s189 = smul.addr %s188, 4
        %s190 = smul.addr %s189, 8
        %s191 = scalar_lea.vmem %s2, %s190
        %p192 = scmp.eq.s32.totalorder %s22, 0
        // Predicated region
        $region29: #{tpu_custom_call.1} parent=23 // pred_check
          %p193 = pneg %p192
        $region30: #{tpu_custom_call.1} parent=23 // pred_check_branch
          %195 = sbr.rel (%p193) target = $region32
        $region31: #{tpu_custom_call.1} parent=23 // pred_region
          %vm196 = vcmask 7168
          %197 = vst.msk [vmem:[#allocation2] sm:$0xff] %vm196, 0.0
          %198 = vst.msk [vmem:[#allocation2 + $0x8] sm:$0xff] %vm196, 0.0
          %199 = vst.msk [vmem:[#allocation2 + $0x10] sm:$0xff] %vm196, 0.0
          %200 = vst.msk [vmem:[#allocation2 + $0x18] sm:$0xff] %vm196, 0.0
          %201 = vst.msk [vmem:[#allocation3] sm:$0xff] %vm196, 0.0
          %202 = vst.msk [vmem:[#allocation3 + $0x8] sm:$0xff] %vm196, 0.0
          %203 = vst.msk [vmem:[#allocation3 + $0x10] sm:$0xff] %vm196, 0.0
          %204 = vst.msk [vmem:[#allocation3 + $0x18] sm:$0xff] %vm196, 0.0
        $region32: #{tpu_custom_call.1} parent=23 // pred_fallthru
          _
        %v205 = vld [vmem:[%s156] sm:$0xff]
        %v206 = vld [vmem:[%s156 + $0x8] sm:$0xff]
        %v207 = vld [vmem:[%s156 + $0x10] sm:$0xff]
        %v208 = vld [vmem:[%s156 + $0x18] sm:$0xff]
        %v209 = vld [vmem:[#allocation2] sm:$0xff]
        %v210 = vld [vmem:[#allocation2 + $0x8] sm:$0xff]
        %v211 = vld [vmem:[#allocation2 + $0x10] sm:$0xff]
        %v212 = vld [vmem:[#allocation2 + $0x18] sm:$0xff]
        %vm213 = vcmask 523264
        %v214 = vsel %vm213, %v205, 0.0
        %215 = vadd.xlane.f32.xlu0 %v214
        %v216 = vpop.xlane.xlu0 %215
        %v217 = vsel %vm213, %v206, 0.0
        %218 = vadd.xlane.f32.xlu0 %v217
        %v219 = vpop.xlane.xlu0 %218
        %v220 = vsel %vm213, %v207, 0.0
        %221 = vadd.xlane.f32.xlu0 %v220
        %v222 = vpop.xlane.xlu0 %221
        %v223 = vsel %vm213, %v208, 0.0
        %224 = vadd.xlane.f32.xlu0 %v223
        %v225 = vpop.xlane.xlu0 %224
        %v226 = vadd.f32 %v209, %v216
        %v227 = vadd.f32 %v210, %v219
        %v228 = vadd.f32 %v211, %v222
        %v229 = vadd.f32 %v212, %v225
        %vm230 = vcmask 7168
        %231 = vst.msk [vmem:[#allocation2] sm:$0xff] %vm230, %v226
        %232 = vst.msk [vmem:[#allocation2 + $0x8] sm:$0xff] %vm230, %v227
        %233 = vst.msk [vmem:[#allocation2 + $0x10] sm:$0xff] %vm230, %v228
        %234 = vst.msk [vmem:[#allocation2 + $0x18] sm:$0xff] %vm230, %v229
        %v235 = vld [vmem:[#allocation3] sm:$0xff]
        %v236 = vld [vmem:[#allocation3 + $0x8] sm:$0xff]
        %v237 = vld [vmem:[#allocation3 + $0x10] sm:$0xff]
        %v238 = vld [vmem:[#allocation3 + $0x18] sm:$0xff]
        %v239 = vmul.f32 %v205, %v205
        %v240 = vmul.f32 %v206, %v206
        %v241 = vmul.f32 %v207, %v207
        %v242 = vmul.f32 %v208, %v208
        %v243 = vsel %vm213, %v239, 0.0
        %244 = vadd.xlane.f32.xlu0 %v243
        %v245 = vpop.xlane.xlu0 %244
        %v246 = vsel %vm213, %v240, 0.0
        %247 = vadd.xlane.f32.xlu0 %v246
        %v248 = vpop.xlane.xlu0 %247
        %v249 = vsel %vm213, %v241, 0.0
        %250 = vadd.xlane.f32.xlu0 %v249
        %v251 = vpop.xlane.xlu0 %250
        %v252 = vsel %vm213, %v242, 0.0
        %253 = vadd.xlane.f32.xlu0 %v252
        %v254 = vpop.xlane.xlu0 %253
        %v255 = vadd.f32 %v235, %v245
        %v256 = vadd.f32 %v236, %v248
        %v257 = vadd.f32 %v237, %v251
        %v258 = vadd.f32 %v238, %v254
        %259 = vst.msk [vmem:[#allocation3] sm:$0xff] %vm230, %v255
        %260 = vst.msk [vmem:[#allocation3 + $0x8] sm:$0xff] %vm230, %v256
        %261 = vst.msk [vmem:[#allocation3 + $0x10] sm:$0xff] %vm230, %v257
        %262 = vst.msk [vmem:[#allocation3 + $0x18] sm:$0xff] %vm230, %v258
        // Predicated region
        $region33: #{tpu_custom_call.1} parent=23 // pred_check
          %p263 = pneg %p192
        $region34: #{tpu_custom_call.1} parent=23 // pred_check_branch
          %265 = sbr.rel (%p263) target = $region36
        $region35: #{tpu_custom_call.1} parent=23 // pred_region
          %v266 = vld [vmem:[#allocation2] sm:$0xff]
          %v267 = vld [vmem:[#allocation2 + $0x8] sm:$0xff]
          %v268 = vld [vmem:[#allocation2 + $0x10] sm:$0xff]
          %v269 = vld [vmem:[#allocation2 + $0x18] sm:$0xff]
          %v270 = vrcp.pop 64.0
          %v271 = vmul.f32 %v266, %v270
          %v272 = vmul.f32 %v267, %v270
          %v273 = vmul.f32 %v268, %v270
          %v274 = vmul.f32 %v269, %v270
          %v275 = vld [vmem:[#allocation3] sm:$0xff]
          %v276 = vld [vmem:[#allocation3 + $0x8] sm:$0xff]
          %v277 = vld [vmem:[#allocation3 + $0x10] sm:$0xff]
          %v278 = vld [vmem:[#allocation3 + $0x18] sm:$0xff]
          %v279 = vmul.f32 %v271, 64.0
          %v280 = vmul.f32 %v272, 64.0
          %v281 = vmul.f32 %v273, 64.0
          %v282 = vmul.f32 %v274, 64.0
          %v283 = vmul.f32 %v279, %v271
          %v284 = vmul.f32 %v280, %v272
          %v285 = vmul.f32 %v281, %v273
          %v286 = vmul.f32 %v282, %v274
          %v287 = vsub.f32 %v275, %v283
          %v288 = vsub.f32 %v276, %v284
          %v289 = vsub.f32 %v277, %v285
          %v290 = vsub.f32 %v278, %v286
          %v291 = vrcp.pop 63.0
          %v292 = vmul.f32 %v287, %v291
          %v293 = vmul.f32 %v288, %v291
          %v294 = vmul.f32 %v289, %v291
          %v295 = vmul.f32 %v290, %v291
          %296 = vst.msk [vmem:[%s186] sm:$0xff] %vm230, %v271
          %297 = vst.msk [vmem:[%s186 + $0x8] sm:$0xff] %vm230, %v272
          %298 = vst.msk [vmem:[%s186 + $0x10] sm:$0xff] %vm230, %v273
          %299 = vst.msk [vmem:[%s186 + $0x18] sm:$0xff] %vm230, %v274
          %v300 = vmax.f32 %v292, 0.0
          %v301 = vmax.f32 %v293, 0.0
          %v302 = vmax.f32 %v294, 0.0
          %v303 = vmax.f32 %v295, 0.0
          %v304 = vadd.f32 %v300, 1e-05
          %v305 = vadd.f32 %v301, 1e-05
          %v306 = vadd.f32 %v302, 1e-05
          %v307 = vadd.f32 %v303, 1e-05
          %v308 = vrsqrt.pop %v304
          %v309 = vrsqrt.pop %v305
          %v310 = vrsqrt.pop %v306
          %v311 = vrsqrt.pop %v307
          %312 = vst.msk [vmem:[%s191] sm:$0xff] %vm230, %v308
          %313 = vst.msk [vmem:[%s191 + $0x8] sm:$0xff] %vm230, %v309
          %314 = vst.msk [vmem:[%s191 + $0x10] sm:$0xff] %vm230, %v310
          %315 = vst.msk [vmem:[%s191 + $0x18] sm:$0xff] %vm230, %v311
        $region36: #{tpu_custom_call.1} parent=23 // pred_fallthru
          _
        %p316 = scmp.lt.s32.totalorder %s21, 1
        %s317 = scalar_select %p316, %s21, 1
        %s318 = smul.addr %s317, 4
        %s319 = smul.addr %s318, 8
        %s320 = scalar_lea.vmem %s1, %s319
        %p321 = scmp.lt.s32.totalorder %s21, 1
        %s322 = scalar_select %p321, %s21, 1
        %s323 = smul.addr %s322, 4
        %s324 = smul.addr %s323, 8
        %s325 = scalar_lea.vmem %s2, %s324
        // Predicated region
        $region37: #{tpu_custom_call.1} parent=23 // pred_check
          %p326 = pneg %p75
        $region38: #{tpu_custom_call.1} parent=23 // pred_check_branch
          %328 = sbr.rel (%p326) target = $region40
        $region39: #{tpu_custom_call.1} parent=23 // pred_region
          _
        $region40: #{tpu_custom_call.1} parent=23 // pred_fallthru
          _
        // Predicated region
        $region41: #{tpu_custom_call.1} parent=23 // pred_check
          %p329 = pneg %p101
        $region42: #{tpu_custom_call.1} parent=23 // pred_check_branch
          %331 = sbr.rel (%p329) target = $region44
        $region43: #{tpu_custom_call.1} parent=23 // pred_region
          _
        $region44: #{tpu_custom_call.1} parent=23 // pred_fallthru
          _
      $region24: #{tpu_custom_call.1} parent=5 // pred_fallthru
        _
      %p332 = scmp.le.s32.totalorder 2, %s12
      // Predicated region
      $region45: #{tpu_custom_call.1} parent=5 // pred_check
        %p333 = pneg %p332
      $region46: #{tpu_custom_call.1} parent=5 // pred_check_branch
        %335 = sbr.rel (%p333) target = $region48
      $region47: #{tpu_custom_call.1} parent=5 // pred_region
        %s336 = ssub.s32 %s12, 2
        // Predicated region
        $region49: #{tpu_custom_call.1} parent=47 // pred_check
          %p337 = pneg %p81
        $region50: #{tpu_custom_call.1} parent=47 // pred_check_branch
          %339 = sbr.rel (%p337) target = $region52
        $region51: #{tpu_custom_call.1} parent=47 // pred_region
          %p340 = scmp.lt.s32.totalorder %s23, 1
          %s341 = scalar_select %p340, %s23, 1
          %s342 = smul.addr %s341, 4
          %s343 = smul.addr %s342, 8
          %s344 = scalar_lea.vmem %s1, %s343
        $region52: #{tpu_custom_call.1} parent=47 // pred_fallthru
          _
        // Predicated region
        $region53: #{tpu_custom_call.1} parent=47 // pred_check
          %p345 = pneg %p107
        $region54: #{tpu_custom_call.1} parent=47 // pred_check_branch
          %347 = sbr.rel (%p345) target = $region56
        $region55: #{tpu_custom_call.1} parent=47 // pred_region
          %p348 = scmp.lt.s32.totalorder %s23, 1
          %s349 = scalar_select %p348, %s23, 1
          %s350 = smul.addr %s349, 4
          %s351 = smul.addr %s350, 8
          %s352 = scalar_lea.vmem %s2, %s351
        $region56: #{tpu_custom_call.1} parent=47 // pred_fallthru
          _
      $region48: #{tpu_custom_call.1} parent=5 // pred_fallthru
        _
    $region6: #{tpu_custom_call.1} parent=1 // loop_footer
      %s16 = sadd.s32 1, %s12
    $region7: #{tpu_custom_call.1} parent=1 // loop_footer_branch
      %11 = sbr.rel target = $region3
    $region8: #{tpu_custom_call.1} parent=1 // loop_exit
      _
    %353 = vsyncpa [#allocation5], 1
    %s354 = scalar_lea.sflag [#allocation5], 1
    %355 = vsyncpa %s354, 1

</llo_original>
